<compile_context>
chip_gen: v7x
topology: tpu7x:2x2x1
jax: 0.10.0
libtpu: 0.0.40
codegen_flags: <defaults>
</compile_context>

<pallas_src>
import jax
import jax.numpy as jnp
from jax.experimental import pallas as pl
from jax.experimental.pallas import tpu as pltpu


LANE = 128      # lane width: hidden dim padded to this so gate slices/stores are lane-dense
TILE_V = 512    # vocab tile streamed per grid step (1024-2048 also fine on v6e/v7x for huge V)


def _round_up(x, m):
    return ((x + m - 1) // m) * m


# ---------------------------------------------------------------------------
# Kernel 1: GRU cell step (tiny; everything resident in VMEM, no grid).
# ---------------------------------------------------------------------------
def gru_step_kernel(x_ref, h_ref, ctx_ref,
                    wih_x_ref, wih_c_ref, whh_ref, bgi_ref, bghn_ref,
                    hnew_ref):
    """x:[B,E]  h/ctx:[B,Hp]  wih_x:[E,3Hp]  wih_c/whh:[Hp,3Hp]  bgi:[1,3Hp]  bghn:[1,Hp]."""
    Hp = h_ref.shape[-1]
    x = x_ref[...]
    h = h_ref[...]
    ctx = ctx_ref[...]
    # split matmuls instead of concat(embedded, context) -> no lane relayouts
    gi = (jnp.dot(x, wih_x_ref[...], preferred_element_type=jnp.float32)
          + jnp.dot(ctx, wih_c_ref[...], preferred_element_type=jnp.float32)
          + bgi_ref[...])                                                   # [B, 3Hp]
    gh = jnp.dot(h, whh_ref[...], preferred_element_type=jnp.float32)       # [B, 3Hp]
    r = jax.nn.sigmoid(gi[:, 0:Hp] + gh[:, 0:Hp])
    z = jax.nn.sigmoid(gi[:, Hp:2 * Hp] + gh[:, Hp:2 * Hp])
    n = jnp.tanh(gi[:, 2 * Hp:3 * Hp] + r * (gh[:, 2 * Hp:3 * Hp] + bghn_ref[...]))
    hnew_ref[...] = (1.0 - z) * n + z * h                                    # [B, Hp]


# ---------------------------------------------------------------------------
# Kernel 2: output projection, tiled over the vocab; merged weight streamed in bf16.
# ---------------------------------------------------------------------------
def out_proj_kernel(a_ref, w_ref, b_ref, pred_ref):
    """a:[B,E+2Hp] f32 (resident)  w:[E+2Hp,tile_v] bf16 (streamed)  b:[1,tile_v] f32."""
    a = a_ref[...].astype(w_ref.dtype)        # bf16 LHS -> native bf16 x bf16 MXU path
    pred = jnp.dot(a, w_ref[...], preferred_element_type=jnp.float32) + b_ref[...]
    pred_ref[...] = pred.astype(pred_ref.dtype)


def prepare_decoder_params(params, emb_dim, hid_dim, output_dim, tile_v=TILE_V):
    """Host-side (one-time) split / merge / bias-fold / lane-pad / bf16 cast."""
    E, H, V = emb_dim, hid_dim, output_dim
    Hp = _round_up(H, LANE)
    tile_v = min(tile_v, _round_up(V, LANE))   # small-V bypass: single grid step, no waste
    Vp = _round_up(V, tile_v)

    def pad_cols(a, new):
        return jnp.pad(a, ((0, 0), (0, new - a.shape[1])))

    def pad_rows(a, new):
        return jnp.pad(a, ((0, new - a.shape[0]), (0, 0)))

    def pad_gate_cols(w):  # [rows, 3H] -> [rows, 3Hp], pad each gate block separately
        r, z, n = w[:, :H], w[:, H:2 * H], w[:, 2 * H:3 * H]
        return jnp.concatenate([pad_cols(r, Hp), pad_cols(z, Hp), pad_cols(n, Hp)], axis=1)

    wih_t, whh_t = params["wih_t"], params["whh_t"]
    bih, bhh = params["bih"], params["bhh"]
    wout_t, bout = params["wout_t"], params["bout"]

    # fold r/z biases of b_hh into the gi bias; keep b_hh_n separate (must sit inside r*(...))
    bgi = bih + jnp.concatenate(
        [bhh[:, :H], bhh[:, H:2 * H], jnp.zeros((1, H), bih.dtype)], axis=1)

    # merge the three projection weight blocks into one [E+2Hp, Vp] matrix -> one DMA and one
    # MXU dot per vocab tile; stream it in bf16 (pure weight streaming, f32 accumulation)
    wout = jnp.concatenate([
        wout_t[:E],                           # embedded rows
        pad_rows(wout_t[E:E + H], Hp),        # h_new rows (padded lanes of h_new are exactly 0)
        pad_rows(wout_t[E + H:], Hp),         # context rows
    ], axis=0)
    wout = pad_cols(wout, Vp).astype(jnp.bfloat16)                # [E+2Hp, Vp] bf16

    return {
        "embedding": params["embedding"],                         # [V, E]
        "wih_x": pad_gate_cols(wih_t[:E]),                        # [E,  3Hp]
        "wih_c": pad_rows(pad_gate_cols(wih_t[E:]), Hp),          # [Hp, 3Hp]
        "whh":   pad_rows(pad_gate_cols(whh_t), Hp),              # [Hp, 3Hp]
        "bgi":   pad_gate_cols(bgi),                              # [1,  3Hp]
        "bghn":  pad_cols(bhh[:, 2 * H:3 * H], Hp),               # [1,  Hp]
        "wout":  wout,                                            # [E+2Hp, Vp] bf16
        "bout":  pad_cols(bout, Vp),                              # [1,  Vp]  f32
        "dims": (E, H, Hp, V, Vp, tile_v),
    }


def decoder_forward(tokens, hidden, context, kparams):
    """Mirror of Decoder.forward (eval mode).

    tokens : int32 [B];  hidden/context : f32 [1, B, H]
    returns (prediction [B, V], hidden [1, B, H])
    """
    E, H, Hp, V, Vp, tile_v = kparams["dims"]
    B = tokens.shape[0]

    # glue: embedding gather + squeeze seq axis + lane-pad hidden/context (pad lanes stay 0)
    # TODO(synk): fuse the gather into the kernel (PrefetchScalarGridSpec + pl.Element).
    x = jnp.take(kparams["embedding"], tokens, axis=0)            # [B, E]
    h0 = jnp.pad(hidden[0], ((0, 0), (0, Hp - H)))                # [B, Hp]
    ctx = jnp.pad(context[0], ((0, 0), (0, Hp - H)))              # [B, Hp]

    # ---- kernel 1: GRU cell step (dropout == identity in eval mode) ----
    h_new = pl.pallas_call(
        gru_step_kernel,
        out_shape=jax.ShapeDtypeStruct((B, Hp), jnp.float32),
    )(x, h0, ctx, kparams["wih_x"], kparams["wih_c"], kparams["whh"],
      kparams["bgi"], kparams["bghn"])

    # ---- kernel 2: output projection, streamed / tiled over the vocab axis ----
    # cat(embedded, h_new, ctx) built once here (tiny) so each tile is a single dot.
    a = jnp.concatenate([x, h_new, ctx], axis=1)                  # [B, E + 2Hp]
    K = E + 2 * Hp
    n_tiles = Vp // tile_v

    grid_spec = pltpu.PrefetchScalarGridSpec(
        num_scalar_prefetch=0,
        grid=(n_tiles,),
        in_specs=[
            pl.BlockSpec((B, K), lambda j: (0, 0)),               # activation (resident)
            pl.BlockSpec((K, tile_v), lambda j: (0, j)),          # bf16 weight tile (streamed)
            pl.BlockSpec((1, tile_v), lambda j: (0, j)),          # bias tile (streamed)
        ],
        out_specs=pl.BlockSpec((B, tile_v), lambda j: (0, j)),    # lane-dense pred tile
    )

    pred_p = pl.pallas_call(
        out_proj_kernel,
        out_shape=jax.ShapeDtypeStruct((B, Vp), jnp.float32),
        grid_spec=grid_spec,
        compiler_params=pltpu.CompilerParams(
            # No cross-tile carry -> the V axis can megacore-shard (2 TCs on v7x).
            dimension_semantics=("parallel",),
            # vmem_limit_bytes only needed if TILE_V is pushed >= 1024 in f32; bf16 @ 512
            # double-buffered is well under every chip's default scoped VMEM.
        ),
    )(a, kparams["wout"], kparams["bout"])

    # slice off zero padding (padded V columns are exactly 0; padded H lanes stay 0)
    return pred_p[:, :V], h_new[:, :H][None]                      # [B, V], [1, B, H]


def decoder_reference(tokens, hidden, context, params):
    """Pure-JAX f32 reference matching PyTorch semantics (eval mode), unpadded / unfused."""
    emb = jnp.take(params["embedding"], tokens, axis=0)
    h = hidden[0]
    ctx = context[0]
    H = h.shape[-1]
    xc = jnp.concatenate([emb, ctx], axis=1)
    gi = xc @ params["wih_t"] + params["bih"]
    gh = h @ params["whh_t"] + params["bhh"]
    r = jax.nn.sigmoid(gi[:, :H] + gh[:, :H])
    z = jax.nn.sigmoid(gi[:, H:2 * H] + gh[:, H:2 * H])
    n = jnp.tanh(gi[:, 2 * H:] + r * gh[:, 2 * H:])
    h_new = (1.0 - z) * n + z * h
    out_cat = jnp.concatenate([emb, h_new, ctx], axis=1)
    pred = out_cat @ params["wout_t"] + params["bout"]
    return pred, h_new[None]


def init_params(key, output_dim, emb_dim, hid_dim):
    ks = jax.random.split(key, 7)
    s = 0.1
    return {
        "embedding": jax.random.normal(ks[0], (output_dim, emb_dim), jnp.float32) * s,
        # GRU: weight_ih_l0 is [3H, E+H] in PyTorch; store transposed for x @ W^T
        "wih_t": jax.random.normal(ks[1], (emb_dim + hid_dim, 3 * hid_dim), jnp.float32) * s,
        "whh_t": jax.random.normal(ks[2], (hid_dim, 3 * hid_dim), jnp.float32) * s,
        "bih": jax.random.normal(ks[3], (1, 3 * hid_dim), jnp.float32) * s,
        "bhh": jax.random.normal(ks[4], (1, 3 * hid_dim), jnp.float32) * s,
        # Linear: weight is [V, E+2H] in PyTorch; store transposed
        "wout_t": jax.random.normal(ks[5], (emb_dim + 2 * hid_dim, output_dim), jnp.float32) * s,
        "bout": jax.random.normal(ks[6], (1, output_dim), jnp.float32) * s,
    }


if __name__ == "__main__":
    OUTPUT_DIM = 300   # vocab size (not 128-aligned -> exercises V padding / small-V bypass)
    EMB_DIM = 16
    HID_DIM = 32
    BATCH = 8

    key = jax.random.PRNGKey(0)
    k_tok, k_h, k_c, k_p = jax.random.split(key, 4)

    tokens = jax.random.randint(k_tok, (BATCH,), 0, OUTPUT_DIM, dtype=jnp.int32)
    hidden = jax.random.normal(k_h, (1, BATCH, HID_DIM), jnp.float32)
    context = jax.random.normal(k_c, (1, BATCH, HID_DIM), jnp.float32)
    params = init_params(k_p, OUTPUT_DIM, EMB_DIM, HID_DIM)

    kparams = prepare_decoder_params(params, EMB_DIM, HID_DIM, OUTPUT_DIM)

    pred, h_new = decoder_forward(tokens, hidden, context, kparams)
    jax.block_until_ready((pred, h_new))

    pred_ref, h_ref = decoder_reference(tokens, hidden, context, params)
    assert pred.shape == (BATCH, OUTPUT_DIM)
    assert h_new.shape == (1, BATCH, HID_DIM)

    # hidden state is computed fully in f32 -> tight check
    assert jnp.allclose(h_new, h_ref, atol=1e-4, rtol=1e-4)

    # prediction streams bf16 weights -> bf16-level tolerance vs the pure-f32 reference
    assert jnp.allclose(pred, pred_ref, atol=2e-2, rtol=2e-2)

    # tight structural check: same math with projection weights/activations quantized to
    # bf16 (what the kernel actually computes) and f32 accumulation
    emb = jnp.take(params["embedding"], tokens, axis=0)
    a_q = jnp.concatenate([emb, h_new[0], context[0]], axis=1)
    a_q = a_q.astype(jnp.bfloat16).astype(jnp.float32)
    w_q = params["wout_t"].astype(jnp.bfloat16).astype(jnp.float32)
    pred_q = a_q @ w_q + params["bout"]
    assert jnp.allclose(pred, pred_q, atol=1e-3, rtol=1e-3)

    print("KERNEL_OK")
</pallas_src>

<mosaic_0001>
module attributes {stable_mosaic.version = 11 : i64} {
  func.func @gru_step_kernel(%arg0: memref<8x16xf32, #tpu.memory_space<vmem>>, %arg1: memref<8x128xf32, #tpu.memory_space<vmem>>, %arg2: memref<8x128xf32, #tpu.memory_space<vmem>>, %arg3: memref<16x384xf32, #tpu.memory_space<vmem>>, %arg4: memref<128x384xf32, #tpu.memory_space<vmem>>, %arg5: memref<128x384xf32, #tpu.memory_space<vmem>>, %arg6: memref<1x384xf32, #tpu.memory_space<vmem>>, %arg7: memref<1x128xf32, #tpu.memory_space<vmem>>, %arg8: memref<8x128xf32, #tpu.memory_space<vmem>>) attributes {dimension_semantics = [], scalar_prefetch = 0 : i64, scratch_operands = 0 : i64, tpu.core_type = #tpu.core_type<tc>} {
    %c0 = arith.constant 0 : index
    %c0_0 = arith.constant 0 : index
    %0 = vector.load %arg0[%c0, %c0_0] : memref<8x16xf32, #tpu.memory_space<vmem>>, vector<8x16xf32>
    %c0_1 = arith.constant 0 : index
    %c0_2 = arith.constant 0 : index
    %1 = vector.load %arg1[%c0_1, %c0_2] : memref<8x128xf32, #tpu.memory_space<vmem>>, vector<8x128xf32>
    %c0_3 = arith.constant 0 : index
    %c0_4 = arith.constant 0 : index
    %2 = vector.load %arg2[%c0_3, %c0_4] : memref<8x128xf32, #tpu.memory_space<vmem>>, vector<8x128xf32>
    %c0_5 = arith.constant 0 : index
    %c0_6 = arith.constant 0 : index
    %3 = vector.load %arg3[%c0_5, %c0_6] : memref<16x384xf32, #tpu.memory_space<vmem>>, vector<16x384xf32>
    %cst = arith.constant dense<0.000000e+00> : vector<8x384xf32>
    %4 = tpu.matmul %0, %3, %cst {dimension_numbers = #tpu.dot_dimension_numbers<[1], [0], [0], [1], [0, 0, 1, 1], [], []>} : vector<8x16xf32>, vector<16x384xf32>, vector<8x384xf32> -> vector<8x384xf32>
    %c0_7 = arith.constant 0 : index
    %c0_8 = arith.constant 0 : index
    %5 = vector.load %arg4[%c0_7, %c0_8] : memref<128x384xf32, #tpu.memory_space<vmem>>, vector<128x384xf32>
    %cst_9 = arith.constant dense<0.000000e+00> : vector<8x384xf32>
    %6 = tpu.matmul %2, %5, %cst_9 {dimension_numbers = #tpu.dot_dimension_numbers<[1], [0], [0], [1], [0, 0, 1, 1], [], []>} : vector<8x128xf32>, vector<128x384xf32>, vector<8x384xf32> -> vector<8x384xf32>
    %7 = arith.addf %4, %6 : vector<8x384xf32>
    %c0_10 = arith.constant 0 : index
    %c0_11 = arith.constant 0 : index
    %8 = vector.load %arg6[%c0_10, %c0_11] : memref<1x384xf32, #tpu.memory_space<vmem>>, vector<1x384xf32>
    %9 = vector.broadcast %8 : vector<1x384xf32> to vector<8x384xf32>
    %10 = arith.addf %7, %9 : vector<8x384xf32>
    %c0_12 = arith.constant 0 : index
    %c0_13 = arith.constant 0 : index
    %11 = vector.load %arg5[%c0_12, %c0_13] : memref<128x384xf32, #tpu.memory_space<vmem>>, vector<128x384xf32>
    %cst_14 = arith.constant dense<0.000000e+00> : vector<8x384xf32>
    %12 = tpu.matmul %1, %11, %cst_14 {dimension_numbers = #tpu.dot_dimension_numbers<[1], [0], [0], [1], [0, 0, 1, 1], [], []>} : vector<8x128xf32>, vector<128x384xf32>, vector<8x384xf32> -> vector<8x384xf32>
    %13 = vector.extract_strided_slice %10 {offsets = [0, 0], sizes = [8, 128], strides = [1, 1]} : vector<8x384xf32> to vector<8x128xf32>
    %14 = vector.extract_strided_slice %12 {offsets = [0, 0], sizes = [8, 128], strides = [1, 1]} : vector<8x384xf32> to vector<8x128xf32>
    %15 = arith.addf %13, %14 : vector<8x128xf32>
    %16 = arith.negf %15 : vector<8x128xf32>
    %17 = math.exp %16 : vector<8x128xf32>
    %cst_15 = arith.constant 1.000000e+00 : f32
    %18 = vector.broadcast %cst_15 : f32 to vector<8x128xf32>
    %19 = arith.addf %18, %17 : vector<8x128xf32>
    %20 = arith.divf %18, %19 : vector<8x128xf32>
    %21 = vector.extract_strided_slice %10 {offsets = [0, 128], sizes = [8, 128], strides = [1, 1]} : vector<8x384xf32> to vector<8x128xf32>
    %22 = vector.extract_strided_slice %12 {offsets = [0, 128], sizes = [8, 128], strides = [1, 1]} : vector<8x384xf32> to vector<8x128xf32>
    %23 = arith.addf %21, %22 : vector<8x128xf32>
    %24 = arith.negf %23 : vector<8x128xf32>
    %25 = math.exp %24 : vector<8x128xf32>
    %cst_16 = arith.constant 1.000000e+00 : f32
    %26 = vector.broadcast %cst_16 : f32 to vector<8x128xf32>
    %27 = arith.addf %26, %25 : vector<8x128xf32>
    %28 = arith.divf %26, %27 : vector<8x128xf32>
    %29 = vector.extract_strided_slice %10 {offsets = [0, 256], sizes = [8, 128], strides = [1, 1]} : vector<8x384xf32> to vector<8x128xf32>
    %30 = vector.extract_strided_slice %12 {offsets = [0, 256], sizes = [8, 128], strides = [1, 1]} : vector<8x384xf32> to vector<8x128xf32>
    %c0_17 = arith.constant 0 : index
    %c0_18 = arith.constant 0 : index
    %31 = vector.load %arg7[%c0_17, %c0_18] : memref<1x128xf32, #tpu.memory_space<vmem>>, vector<1x128xf32>
    %32 = vector.broadcast %31 : vector<1x128xf32> to vector<8x128xf32>
    %33 = arith.addf %30, %32 : vector<8x128xf32>
    %34 = arith.mulf %20, %33 : vector<8x128xf32>
    %35 = arith.addf %29, %34 : vector<8x128xf32>
    %36 = math.tanh %35 : vector<8x128xf32>
    %cst_19 = arith.constant 1.000000e+00 : f32
    %37 = vector.broadcast %cst_19 : f32 to vector<8x128xf32>
    %38 = arith.subf %37, %28 : vector<8x128xf32>
    %39 = arith.mulf %38, %36 : vector<8x128xf32>
    %40 = arith.mulf %28, %1 : vector<8x128xf32>
    %41 = arith.addf %39, %40 : vector<8x128xf32>
    %c0_20 = arith.constant 0 : index
    %c0_21 = arith.constant 0 : index
    %42 = vector.load %arg8[%c0_20, %c0_21] : memref<8x128xf32, #tpu.memory_space<vmem>>, vector<8x128xf32>
    tpu.vector_store %arg8[%c0_20, %c0_21], %41 {strides = array<i32>} : memref<8x128xf32, #tpu.memory_space<vmem>>, vector<8x128xf32>,
    return
  }
}

</mosaic_0001>

<llo_original>
// kernel: tpu_custom_call.1
$region0: #{tpu_custom_call.1}
  #allocation0 [shape = 'u32[]', space=smem, size = 0x4, offset = 0x4, fixed_abs, tag = 'smem constant byte address 0x4 - core index']
  #allocation1 [shape = 'u32[144,128]{1,0:T(1,128)}', space=vmem, size = 0x12000, scoped, tag = 'internal scratch']
  %s0 = inlined_call_operand.hbm [shape: f32[8,16], index: 0, kind: input, shape index: {}]
  %s1 = inlined_call_operand.hbm [shape: f32[8,128], index: 1, kind: input, shape index: {}]
  %s2 = inlined_call_operand.hbm [shape: f32[8,128], index: 2, kind: input, shape index: {}]
  %s3 = inlined_call_operand.hbm [shape: f32[16,384], index: 3, kind: input, shape index: {}]
  %s4 = inlined_call_operand.hbm [shape: f32[128,384], index: 4, kind: input, shape index: {}]
  %s5 = inlined_call_operand.hbm [shape: f32[128,384], index: 5, kind: input, shape index: {}]
  %s6 = inlined_call_operand.vmem [shape: f32[1,384], index: 6, kind: input, shape index: {}]
  %s7 = inlined_call_operand.vmem [shape: f32[1,128], index: 7, kind: input, shape index: {}]
  %s8 = inlined_call_operand.hbm [shape: f32[8,128], index: 8, kind: output, shape index: {}]
  %s9 = sld [smem:[#allocation0]]
  $region66: #{tpu_custom_call.1} parent=0
    _
  %s11 = ssub.s32 1, %s9
  %s12 = scalar_select 0, %s11, %s9
  $region1: #{tpu_custom_call.1} parent=0
    #allocation2 [shape = 'u8[4096]{0}', space=vmem, size = 0x1000, scoped, tag = 'input window, operand 0, single buffered']
    #allocation3 [shape = 's32[1]{0}', space=sflag, size = 0x4, scoped, tag = 'scoped memory for tpu_custom_call.1']
    #allocation4 [shape = 's32[1]{0}', space=sflag, size = 0x4, scoped, tag = 'scoped memory for tpu_custom_call.1']
    #allocation5 [shape = 'u8[4096]{0}', space=vmem, size = 0x1000, scoped, tag = 'input window, operand 1, single buffered']
    #allocation6 [shape = 's32[1]{0}', space=sflag, size = 0x4, scoped, tag = 'scoped memory for tpu_custom_call.1']
    #allocation7 [shape = 'u8[4096]{0}', space=vmem, size = 0x1000, scoped, tag = 'input window, operand 2, single buffered']
    #allocation8 [shape = 'u8[24576]{0}', space=vmem, size = 0x6000, scoped, tag = 'input window, operand 3, single buffered']
    #allocation9 [shape = 's32[1]{0}', space=sflag, size = 0x4, scoped, tag = 'scoped memory for tpu_custom_call.1']
    #allocation10 [shape = 'u8[196608]{0}', space=vmem, size = 0x30000, scoped, tag = 'input window, operand 4, single buffered']
    #allocation11 [shape = 'u8[196608]{0}', space=vmem, size = 0x30000, scoped, tag = 'input window, operand 5, single buffered']
    #allocation12 [shape = 's32[1]{0}', space=sflag, size = 0x4, scoped, tag = 'scoped memory for tpu_custom_call.1']
    #allocation13 [shape = 'u8[4096]{0}', space=vmem, size = 0x1000, scoped, tag = 'output window, operand 0, single buffered']
    %13 = vsyncpa [#allocation3], 0
    %14 = vsyncpa [#allocation6], 0
    %15 = vsyncpa [#allocation9], 0
    %16 = vsyncpa [#allocation12], 0
    %17 = vsyncpa [#allocation4], 0
    // Predicated region
    $region2: #{tpu_custom_call.1} parent=1 // pred_check
      _
    $region3: #{tpu_custom_call.1} parent=1 // pred_check_branch
      %19 = sbr.rel (0) target = $region5
    $region4: #{tpu_custom_call.1} parent=1 // pred_region
      %s21 = ssub.s32 128, 128
      %22 = vsyncadd [#allocation3], %s21
      %s24 = sshll.u32 [#allocation2], 4
      %s25 = int_to_ptr.vmem [resolvable:$true] %s24
      %27 = dma.hbm_to_vmem [thread:$0]  %s0, 128, %s25, [#allocation3]
    $region5: #{tpu_custom_call.1} parent=1 // pred_fallthru
      _
    // Predicated region
    $region6: #{tpu_custom_call.1} parent=1 // pred_check
      _
    $region7: #{tpu_custom_call.1} parent=1 // pred_check_branch
      %29 = sbr.rel (0) target = $region9
    $region8: #{tpu_custom_call.1} parent=1 // pred_region
      %s31 = ssub.s32 128, 128
      %32 = vsyncadd [#allocation6], %s31
      %s34 = sshll.u32 [#allocation5], 4
      %s35 = int_to_ptr.vmem [resolvable:$true] %s34
      %37 = dma.hbm_to_vmem [thread:$0]  %s1, 128, %s35, [#allocation6]
    $region9: #{tpu_custom_call.1} parent=1 // pred_fallthru
      _
    // Predicated region
    $region10: #{tpu_custom_call.1} parent=1 // pred_check
      _
    $region11: #{tpu_custom_call.1} parent=1 // pred_check_branch
      %39 = sbr.rel (0) target = $region13
    $region12: #{tpu_custom_call.1} parent=1 // pred_region
      %s41 = ssub.s32 128, 128
      %42 = vsyncadd [#allocation6], %s41
      %s44 = sshll.u32 [#allocation7], 4
      %s45 = int_to_ptr.vmem [resolvable:$true] %s44
      %47 = dma.hbm_to_vmem [thread:$0]  %s2, 128, %s45, [#allocation6]
    $region13: #{tpu_custom_call.1} parent=1 // pred_fallthru
      _
    // Predicated region
    $region14: #{tpu_custom_call.1} parent=1 // pred_check
      _
    $region15: #{tpu_custom_call.1} parent=1 // pred_check_branch
      %49 = sbr.rel (0) target = $region17
    $region16: #{tpu_custom_call.1} parent=1 // pred_region
      %s51 = ssub.s32 768, 768
      %52 = vsyncadd [#allocation9], %s51
      %s53 = sshll.u32 [#allocation8], 4
      %s54 = int_to_ptr.vmem [resolvable:$true] %s53
      %59 = dma.hbm_to_vmem [thread:$0]  %s3, 768, %s54, [#allocation9], 384, 384, 24
    $region17: #{tpu_custom_call.1} parent=1 // pred_fallthru
      _
    // Predicated region
    $region18: #{tpu_custom_call.1} parent=1 // pred_check
      _
    $region19: #{tpu_custom_call.1} parent=1 // pred_check_branch
      %61 = sbr.rel (0) target = $region21
    $region20: #{tpu_custom_call.1} parent=1 // pred_region
      %s63 = ssub.s32 6144, 6144
      %64 = vsyncadd [#allocation9], %s63
      %s65 = sshll.u32 [#allocation10], 4
      %s66 = int_to_ptr.vmem [resolvable:$true] %s65
      %71 = dma.hbm_to_vmem [thread:$0]  %s4, 6144, %s66, [#allocation9], 384, 384, 24
    $region21: #{tpu_custom_call.1} parent=1 // pred_fallthru
      _
    // Predicated region
    $region22: #{tpu_custom_call.1} parent=1 // pred_check
      _
    $region23: #{tpu_custom_call.1} parent=1 // pred_check_branch
      %73 = sbr.rel (0) target = $region25
    $region24: #{tpu_custom_call.1} parent=1 // pred_region
      %s75 = ssub.s32 6144, 6144
      %76 = vsyncadd [#allocation12], %s75
      %s77 = sshll.u32 [#allocation11], 4
      %s78 = int_to_ptr.vmem [resolvable:$true] %s77
      %83 = dma.hbm_to_vmem [thread:$0]  %s5, 6144, %s78, [#allocation12], 384, 384, 24
    $region25: #{tpu_custom_call.1} parent=1 // pred_fallthru
      _
    // Predicated region
    $region26: #{tpu_custom_call.1} parent=1 // pred_check
      _
    $region27: #{tpu_custom_call.1} parent=1 // pred_check_branch
      %85 = sbr.rel (0) target = $region29
    $region28: #{tpu_custom_call.1} parent=1 // pred_region
      _
    $region29: #{tpu_custom_call.1} parent=1 // pred_fallthru
      _
    // Predicated region
    $region30: #{tpu_custom_call.1} parent=1 // pred_check
      _
    $region31: #{tpu_custom_call.1} parent=1 // pred_check_branch
      %87 = sbr.rel (0) target = $region33
    $region32: #{tpu_custom_call.1} parent=1 // pred_region
      _
    $region33: #{tpu_custom_call.1} parent=1 // pred_fallthru
      _
    // Predicated region
    $region34: #{tpu_custom_call.1} parent=1 // pred_check
      _
    $region35: #{tpu_custom_call.1} parent=1 // pred_check_branch
      %89 = sbr.rel (0) target = $region37
    $region36: #{tpu_custom_call.1} parent=1 // pred_region
      %90 = dma.done [#allocation3], 128
    $region37: #{tpu_custom_call.1} parent=1 // pred_fallthru
      _
    // Predicated region
    $region38: #{tpu_custom_call.1} parent=1 // pred_check
      _
    $region39: #{tpu_custom_call.1} parent=1 // pred_check_branch
      %92 = sbr.rel (0) target = $region41
    $region40: #{tpu_custom_call.1} parent=1 // pred_region
      %93 = dma.done [#allocation6], 128
    $region41: #{tpu_custom_call.1} parent=1 // pred_fallthru
      _
    // Predicated region
    $region42: #{tpu_custom_call.1} parent=1 // pred_check
      _
    $region43: #{tpu_custom_call.1} parent=1 // pred_check_branch
      %95 = sbr.rel (0) target = $region45
    $region44: #{tpu_custom_call.1} parent=1 // pred_region
      %96 = dma.done [#allocation6], 128
    $region45: #{tpu_custom_call.1} parent=1 // pred_fallthru
      _
    // Predicated region
    $region46: #{tpu_custom_call.1} parent=1 // pred_check
      _
    $region47: #{tpu_custom_call.1} parent=1 // pred_check_branch
      %98 = sbr.rel (0) target = $region49
    $region48: #{tpu_custom_call.1} parent=1 // pred_region
      %99 = dma.done [#allocation9], 768
    $region49: #{tpu_custom_call.1} parent=1 // pred_fallthru
      _
    // Predicated region
    $region50: #{tpu_custom_call.1} parent=1 // pred_check
      _
    $region51: #{tpu_custom_call.1} parent=1 // pred_check_branch
      %101 = sbr.rel (0) target = $region53
    $region52: #{tpu_custom_call.1} parent=1 // pred_region
      %102 = dma.done [#allocation9], 6144
    $region53: #{tpu_custom_call.1} parent=1 // pred_fallthru
      _
    // Predicated region
    $region54: #{tpu_custom_call.1} parent=1 // pred_check
      _
    $region55: #{tpu_custom_call.1} parent=1 // pred_check_branch
      %104 = sbr.rel (0) target = $region57
    $region56: #{tpu_custom_call.1} parent=1 // pred_region
      %105 = dma.done [#allocation12], 6144
    $region57: #{tpu_custom_call.1} parent=1 // pred_fallthru
      _
    %v106 = vld [vmem:[#allocation2] sm:$0xff]
    %v107 = vld [vmem:[#allocation5] sm:$0xff]
    %v108 = vld [vmem:[#allocation7] sm:$0xff]
    %v109 = vld [vmem:[#allocation8] sm:$0xff]
    %v110 = vld [vmem:[#allocation8 + $0x8] sm:$0xff]
    %v111 = vld [vmem:[#allocation8 + $0x10] sm:$0xff]
    %v112 = vld [vmem:[#allocation8 + $0x18] sm:$0xff]
    %v113 = vld [vmem:[#allocation8 + $0x20] sm:$0xff]
    %v114 = vld [vmem:[#allocation8 + $0x28] sm:$0xff]
    %v115 = vld [vmem:[#allocation10] sm:$0xff]
    %v116 = vld [vmem:[#allocation10 + $0x8] sm:$0xff]
    %v117 = vld [vmem:[#allocation10 + $0x10] sm:$0xff]
    %v118 = vld [vmem:[#allocation10 + $0x18] sm:$0xff]
    %v119 = vld [vmem:[#allocation10 + $0x20] sm:$0xff]
    %v120 = vld [vmem:[#allocation10 + $0x28] sm:$0xff]
    %v121 = vld [vmem:[#allocation10 + $0x30] sm:$0xff]
    %v122 = vld [vmem:[#allocation10 + $0x38] sm:$0xff]
    %v123 = vld [vmem:[#allocation10 + $0x40] sm:$0xff]
    %v124 = vld [vmem:[#allocation10 + $0x48] sm:$0xff]
    %v125 = vld [vmem:[#allocation10 + $0x50] sm:$0xff]
    %v126 = vld [vmem:[#allocation10 + $0x58] sm:$0xff]
    %v127 = vld [vmem:[#allocation10 + $0x60] sm:$0xff]
    %v128 = vld [vmem:[#allocation10 + $0x68] sm:$0xff]
    %v129 = vld [vmem:[#allocation10 + $0x70] sm:$0xff]
    %v130 = vld [vmem:[#allocation10 + $0x78] sm:$0xff]
    %v131 = vld [vmem:[#allocation10 + $0x80] sm:$0xff]
    %v132 = vld [vmem:[#allocation10 + $0x88] sm:$0xff]
    %v133 = vld [vmem:[#allocation10 + $0x90] sm:$0xff]
    %v134 = vld [vmem:[#allocation10 + $0x98] sm:$0xff]
    %v135 = vld [vmem:[#allocation10 + $0xa0] sm:$0xff]
    %v136 = vld [vmem:[#allocation10 + $0xa8] sm:$0xff]
    %v137 = vld [vmem:[#allocation10 + $0xb0] sm:$0xff]
    %v138 = vld [vmem:[#allocation10 + $0xb8] sm:$0xff]
    %v139 = vld [vmem:[#allocation10 + $0xc0] sm:$0xff]
    %v140 = vld [vmem:[#allocation10 + $0xc8] sm:$0xff]
    %v141 = vld [vmem:[#allocation10 + $0xd0] sm:$0xff]
    %v142 = vld [vmem:[#allocation10 + $0xd8] sm:$0xff]
    %v143 = vld [vmem:[#allocation10 + $0xe0] sm:$0xff]
    %v144 = vld [vmem:[#allocation10 + $0xe8] sm:$0xff]
    %v145 = vld [vmem:[#allocation10 + $0xf0] sm:$0xff]
    %v146 = vld [vmem:[#allocation10 + $0xf8] sm:$0xff]
    %v147 = vld [vmem:[#allocation10 + $0x100] sm:$0xff]
    %v148 = vld [vmem:[#allocation10 + $0x108] sm:$0xff]
    %v149 = vld [vmem:[#allocation10 + $0x110] sm:$0xff]
    %v150 = vld [vmem:[#allocation10 + $0x118] sm:$0xff]
    %v151 = vld [vmem:[#allocation10 + $0x120] sm:$0xff]
    %v152 = vld [vmem:[#allocation10 + $0x128] sm:$0xff]
    %v153 = vld [vmem:[#allocation10 + $0x130] sm:$0xff]
    %v154 = vld [vmem:[#allocation10 + $0x138] sm:$0xff]
    %v155 = vld [vmem:[#allocation10 + $0x140] sm:$0xff]
    %v156 = vld [vmem:[#allocation10 + $0x148] sm:$0xff]
    %v157 = vld [vmem:[#allocation10 + $0x150] sm:$0xff]
    %v158 = vld [vmem:[#allocation10 + $0x158] sm:$0xff]
    %v159 = vld [vmem:[#allocation10 + $0x160] sm:$0xff]
    %v160 = vld [vmem:[#allocation10 + $0x168] sm:$0xff]
    %v161 = vld [vmem:[#allocation10 + $0x170] sm:$0xff]
    %v162 = vld [vmem:[#allocation10 + $0x178] sm:$0xff]
    %163 = vmatprep.subr.mxu0 %v116
    %164 = vmatpush1.msra.mxu0 %v115
    %165 = vmatprep.subr.mxu0 %v119
    %166 = vmatpush1.msra.mxu0 %v118
    %167 = vmatprep.subr.mxu0 %v122
    %168 = vmatpush1.msra.mxu0 %v121
    %169 = vmatprep.subr.mxu0 %v125
    %170 = vmatpush1.msra.mxu0 %v124
    %171 = vmatprep.subr.mxu0 %v128
    %172 = vmatpush1.msra.mxu0 %v127
    %173 = vmatprep.subr.mxu0 %v131
    %174 = vmatpush1.msra.mxu0 %v130
    %175 = vmatprep.subr.mxu0 %v134
    %176 = vmatpush1.msra.mxu0 %v133
    %177 = vmatprep.subr.mxu0 %v137
    %178 = vmatpush1.msra.mxu0 %v136
    %179 = vmatprep.subr.mxu0 %v140
    %180 = vmatpush1.msra.mxu0 %v139
    %181 = vmatprep.subr.mxu0 %v143
    %182 = vmatpush1.msra.mxu0 %v142
    %183 = vmatprep.subr.mxu0 %v146
    %184 = vmatpush1.msra.mxu0 %v145
    %185 = vmatprep.subr.mxu0 %v149
    %186 = vmatpush1.msra.mxu0 %v148
    %187 = vmatprep.subr.mxu0 %v152
    %188 = vmatpush1.msra.mxu0 %v151
    %189 = vmatprep.subr.mxu0 %v155
    %190 = vmatpush1.msra.mxu0 %v154
    %191 = vmatprep.subr.mxu0 %v158
    %192 = vmatpush1.msra.mxu0 %v157
    %193 = vmatprep.subr.mxu0 %v161
    %194 = vmatpush1.msra.mxu0 %v160
    %195 = vmatprep.subr.mxu0 0.0
    %196 = vmatpush1.msra.mxu0 0.0
    %197 = vmatprep.subr.mxu0 0.0
    %198 = vmatpush1.msra.mxu0 0.0
    %199 = vmatprep.subr.mxu0 0.0
    %200 = vmatpush1.msra.mxu0 0.0
    %201 = vmatprep.subr.mxu0 0.0
    %202 = vmatpush1.msra.mxu0 0.0
    %203 = vmatprep.subr.mxu0 0.0
    %204 = vmatpush1.msra.mxu0 0.0
    %205 = vmatprep.subr.mxu0 0.0
    %206 = vmatpush1.msra.mxu0 0.0
    %207 = vmatprep.subr.mxu0 0.0
    %208 = vmatpush1.msra.mxu0 0.0
    %209 = vmatprep.subr.mxu0 0.0
    %210 = vmatpush1.msra.mxu0 0.0
    %211 = vmatprep.subr.mxu0 0.0
    %212 = vmatpush1.msra.mxu0 0.0
    %213 = vmatprep.subr.mxu0 0.0
    %214 = vmatpush1.msra.mxu0 0.0
    %215 = vmatprep.subr.mxu0 0.0
    %216 = vmatpush1.msra.mxu0 0.0
    %217 = vmatprep.subr.mxu0 0.0
    %218 = vmatpush1.msra.mxu0 0.0
    %219 = vmatprep.subr.mxu0 0.0
    %220 = vmatpush1.msra.mxu0 0.0
    %221 = vmatprep.subr.mxu0 0.0
    %222 = vmatpush1.msra.mxu0 0.0
    %223 = vmatprep.subr.mxu0 0.0
    %224 = vmatpush1.msra.mxu0 0.0
    %225 = vmatprep.subr.mxu0 0.0
    %226 = vmatpush1.msra.mxu0 0.0
    %227 = vmatprep.mubr.f32.mxu0 0.0
    %228 = vmatmul.mubr.f32.gmra.mrb[0].mxu0 %v108
    %v229 = vpop.f32.mrb[0].mxu0
    %v230 = vadd.f32 0.0, %v229
    %v231 = vpop.f32.mrb[0].mxu0
    %v232 = vadd.f32 0.0, %v231
    %233 = vdwg.mxu0
    %234 = vmatprep.subr.mxu0 0.0
    %235 = vmatpush1.msra.mxu0 %v117
    %236 = vmatprep.subr.mxu0 0.0
    %237 = vmatpush1.msra.mxu0 %v120
    %238 = vmatprep.subr.mxu0 0.0
    %239 = vmatpush1.msra.mxu0 %v123
    %240 = vmatprep.subr.mxu0 0.0
    %241 = vmatpush1.msra.mxu0 %v126
    %242 = vmatprep.subr.mxu0 0.0
    %243 = vmatpush1.msra.mxu0 %v129
    %244 = vmatprep.subr.mxu0 0.0
    %245 = vmatpush1.msra.mxu0 %v132
    %246 = vmatprep.subr.mxu0 0.0
    %247 = vmatpush1.msra.mxu0 %v135
    %248 = vmatprep.subr.mxu0 0.0
    %249 = vmatpush1.msra.mxu0 %v138
    %250 = vmatprep.subr.mxu0 0.0
    %251 = vmatpush1.msra.mxu0 %v141
    %252 = vmatprep.subr.mxu0 0.0
    %253 = vmatpush1.msra.mxu0 %v144
    %254 = vmatprep.subr.mxu0 0.0
    %255 = vmatpush1.msra.mxu0 %v147
    %256 = vmatprep.subr.mxu0 0.0
    %257 = vmatpush1.msra.mxu0 %v150
    %258 = vmatprep.subr.mxu0 0.0
    %259 = vmatpush1.msra.mxu0 %v153
    %260 = vmatprep.subr.mxu0 0.0
    %261 = vmatpush1.msra.mxu0 %v156
    %262 = vmatprep.subr.mxu0 0.0
    %263 = vmatpush1.msra.mxu0 %v159
    %264 = vmatprep.subr.mxu0 0.0
    %265 = vmatpush1.msra.mxu0 %v162
    %266 = vmatprep.subr.mxu0 0.0
    %267 = vmatpush1.msra.mxu0 0.0
    %268 = vmatprep.subr.mxu0 0.0
    %269 = vmatpush1.msra.mxu0 0.0
    %270 = vmatprep.subr.mxu0 0.0
    %271 = vmatpush1.msra.mxu0 0.0
    %272 = vmatprep.subr.mxu0 0.0
    %273 = vmatpush1.msra.mxu0 0.0
    %274 = vmatprep.subr.mxu0 0.0
    %275 = vmatpush1.msra.mxu0 0.0
    %276 = vmatprep.subr.mxu0 0.0
    %277 = vmatpush1.msra.mxu0 0.0
    %278 = vmatprep.subr.mxu0 0.0
    %279 = vmatpush1.msra.mxu0 0.0
    %280 = vmatprep.subr.mxu0 0.0
    %281 = vmatpush1.msra.mxu0 0.0
    %282 = vmatprep.subr.mxu0 0.0
    %283 = vmatpush1.msra.mxu0 0.0
    %284 = vmatprep.subr.mxu0 0.0
    %285 = vmatpush1.msra.mxu0 0.0
    %286 = vmatprep.subr.mxu0 0.0
    %287 = vmatpush1.msra.mxu0 0.0
    %288 = vmatprep.subr.mxu0 0.0
    %289 = vmatpush1.msra.mxu0 0.0
    %290 = vmatprep.subr.mxu0 0.0
    %291 = vmatpush1.msra.mxu0 0.0
    %292 = vmatprep.subr.mxu0 0.0
    %293 = vmatpush1.msra.mxu0 0.0
    %294 = vmatprep.subr.mxu0 0.0
    %295 = vmatpush1.msra.mxu0 0.0
    %296 = vmatprep.subr.mxu0 0.0
    %297 = vmatpush1.msra.mxu0 0.0
    %298 = vmatprep.mubr.f32.mxu0 0.0
    %299 = vmatmul.mubr.f32.gmra.mrb[0].mxu0 %v108
    %v300 = vpop.f32.mrb[0].mxu0
    %v301 = vadd.f32 0.0, %v300
    %v302 = vpop.f32.mrb[0].mxu0
    %303 = vdwg.mxu0
    %vm304 = vcmask 130048
    %v306 = vsel %vm304, %v106, 0
    %308 = vmatprep.subr.mxu0 %v110
    %309 = vmatpush1.msra.mxu0 %v109
    %310 = vmatprep.subr.mxu0 %v113
    %311 = vmatpush1.msra.mxu0 %v112
    %312 = vmatprep.subr.mxu0 0.0
    %313 = vmatpush1.msra.mxu0 0.0
    %314 = vmatprep.subr.mxu0 0.0
    %315 = vmatpush1.msra.mxu0 0.0
    %316 = vmatprep.subr.mxu0 0.0
    %317 = vmatpush1.msra.mxu0 0.0
    %318 = vmatprep.subr.mxu0 0.0
    %319 = vmatpush1.msra.mxu0 0.0
    %320 = vmatprep.subr.mxu0 0.0
    %321 = vmatpush1.msra.mxu0 0.0
    %322 = vmatprep.subr.mxu0 0.0
    %323 = vmatpush1.msra.mxu0 0.0
    %324 = vmatprep.subr.mxu0 0.0
    %325 = vmatpush1.msra.mxu0 0.0
    %326 = vmatprep.subr.mxu0 0.0
    %327 = vmatpush1.msra.mxu0 0.0
    %328 = vmatprep.subr.mxu0 0.0
    %329 = vmatpush1.msra.mxu0 0.0
    %330 = vmatprep.subr.mxu0 0.0
    %331 = vmatpush1.msra.mxu0 0.0
    %332 = vmatprep.subr.mxu0 0.0
    %333 = vmatpush1.msra.mxu0 0.0
    %334 = vmatprep.subr.mxu0 0.0
    %335 = vmatpush1.msra.mxu0 0.0
    %336 = vmatprep.subr.mxu0 0.0
    %337 = vmatpush1.msra.mxu0 0.0
    %338 = vmatprep.subr.mxu0 0.0
    %339 = vmatpush1.msra.mxu0 0.0
    %340 = vmatprep.subr.mxu0 0.0
    %341 = vmatpush1.msra.mxu0 0.0
    %342 = vmatprep.subr.mxu0 0.0
    %343 = vmatpush1.msra.mxu0 0.0
    %344 = vmatprep.subr.mxu0 0.0
    %345 = vmatpush1.msra.mxu0 0.0
    %346 = vmatprep.subr.mxu0 0.0
    %347 = vmatpush1.msra.mxu0 0.0
    %348 = vmatprep.subr.mxu0 0.0
    %349 = vmatpush1.msra.mxu0 0.0
    %350 = vmatprep.subr.mxu0 0.0
    %351 = vmatpush1.msra.mxu0 0.0
    %352 = vmatprep.subr.mxu0 0.0
    %353 = vmatpush1.msra.mxu0 0.0
    %354 = vmatprep.subr.mxu0 0.0
    %355 = vmatpush1.msra.mxu0 0.0
    %356 = vmatprep.subr.mxu0 0.0
    %357 = vmatpush1.msra.mxu0 0.0
    %358 = vmatprep.subr.mxu0 0.0
    %359 = vmatpush1.msra.mxu0 0.0
    %360 = vmatprep.subr.mxu0 0.0
    %361 = vmatpush1.msra.mxu0 0.0
    %362 = vmatprep.subr.mxu0 0.0
    %363 = vmatpush1.msra.mxu0 0.0
    %364 = vmatprep.subr.mxu0 0.0
    %365 = vmatpush1.msra.mxu0 0.0
    %366 = vmatprep.subr.mxu0 0.0
    %367 = vmatpush1.msra.mxu0 0.0
    %368 = vmatprep.subr.mxu0 0.0
    %369 = vmatpush1.msra.mxu0 0.0
    %370 = vmatprep.subr.mxu0 0.0
    %371 = vmatpush1.msra.mxu0 0.0
    %372 = vmatprep.mubr.f32.mxu0 0.0
    %373 = vmatmul.mubr.f32.gmra.mrb[0].mxu0 %v306
    %v374 = vpop.f32.mrb[0].mxu0
    %v375 = vadd.f32 %v230, %v374
    %v376 = vpop.f32.mrb[0].mxu0
    %v377 = vadd.f32 %v232, %v376
    %378 = vdwg.mxu0
    %379 = vmatprep.subr.mxu0 0.0
    %380 = vmatpush1.msra.mxu0 %v111
    %381 = vmatprep.subr.mxu0 0.0
    %382 = vmatpush1.msra.mxu0 %v114
    %383 = vmatprep.subr.mxu0 0.0
    %384 = vmatpush1.msra.mxu0 0.0
    %385 = vmatprep.subr.mxu0 0.0
    %386 = vmatpush1.msra.mxu0 0.0
    %387 = vmatprep.subr.mxu0 0.0
    %388 = vmatpush1.msra.mxu0 0.0
    %389 = vmatprep.subr.mxu0 0.0
    %390 = vmatpush1.msra.mxu0 0.0
    %391 = vmatprep.subr.mxu0 0.0
    %392 = vmatpush1.msra.mxu0 0.0
    %393 = vmatprep.subr.mxu0 0.0
    %394 = vmatpush1.msra.mxu0 0.0
    %395 = vmatprep.subr.mxu0 0.0
    %396 = vmatpush1.msra.mxu0 0.0
    %397 = vmatprep.subr.mxu0 0.0
    %398 = vmatpush1.msra.mxu0 0.0
    %399 = vmatprep.subr.mxu0 0.0
    %400 = vmatpush1.msra.mxu0 0.0
    %401 = vmatprep.subr.mxu0 0.0
    %402 = vmatpush1.msra.mxu0 0.0
    %403 = vmatprep.subr.mxu0 0.0
    %404 = vmatpush1.msra.mxu0 0.0
    %405 = vmatprep.subr.mxu0 0.0
    %406 = vmatpush1.msra.mxu0 0.0
    %407 = vmatprep.subr.mxu0 0.0
    %408 = vmatpush1.msra.mxu0 0.0
    %409 = vmatprep.subr.mxu0 0.0
    %410 = vmatpush1.msra.mxu0 0.0
    %411 = vmatprep.subr.mxu0 0.0
    %412 = vmatpush1.msra.mxu0 0.0
    %413 = vmatprep.subr.mxu0 0.0
    %414 = vmatpush1.msra.mxu0 0.0
    %415 = vmatprep.subr.mxu0 0.0
    %416 = vmatpush1.msra.mxu0 0.0
    %417 = vmatprep.subr.mxu0 0.0
    %418 = vmatpush1.msra.mxu0 0.0
    %419 = vmatprep.subr.mxu0 0.0
    %420 = vmatpush1.msra.mxu0 0.0
    %421 = vmatprep.subr.mxu0 0.0
    %422 = vmatpush1.msra.mxu0 0.0
    %423 = vmatprep.subr.mxu0 0.0
    %424 = vmatpush1.msra.mxu0 0.0
    %425 = vmatprep.subr.mxu0 0.0
    %426 = vmatpush1.msra.mxu0 0.0
    %427 = vmatprep.subr.mxu0 0.0
    %428 = vmatpush1.msra.mxu0 0.0
    %429 = vmatprep.subr.mxu0 0.0
    %430 = vmatpush1.msra.mxu0 0.0
    %431 = vmatprep.subr.mxu0 0.0
    %432 = vmatpush1.msra.mxu0 0.0
    %433 = vmatprep.subr.mxu0 0.0
    %434 = vmatpush1.msra.mxu0 0.0
    %435 = vmatprep.subr.mxu0 0.0
    %436 = vmatpush1.msra.mxu0 0.0
    %437 = vmatprep.subr.mxu0 0.0
    %438 = vmatpush1.msra.mxu0 0.0
    %439 = vmatprep.subr.mxu0 0.0
    %440 = vmatpush1.msra.mxu0 0.0
    %441 = vmatprep.subr.mxu0 0.0
    %442 = vmatpush1.msra.mxu0 0.0
    %443 = vmatprep.mubr.f32.mxu0 0.0
    %444 = vmatmul.mubr.f32.gmra.mrb[0].mxu0 %v306
    %v445 = vpop.f32.mrb[0].mxu0
    %v446 = vadd.f32 %v301, %v445
    %v447 = vpop.f32.mrb[0].mxu0
    %448 = vdwg.mxu0
    %v449 = vld [vmem:[%s6] sm:$0x7]
    %v451 = vlaneseq
    %v452 = vshrl.u32 %v451, 7
    %v453 = vsub.s32 0, %v452
    %v454 = vrot.slane %v449, %v453
    %v455 = vlaneseq
    %v456 = vshrl.u32 %v455, 7
    %v457 = vsub.s32 1, %v456
    %v458 = vrot.slane %v449, %v457
    %v459 = vlaneseq
    %v460 = vshrl.u32 %v459, 7
    %v461 = vsub.s32 2, %v460
    %v462 = vrot.slane %v449, %v461
    %v466 = vadd.f32 %v375, %v454
    %v467 = vadd.f32 %v377, %v458
    %v468 = vadd.f32 %v446, %v462
    %v469 = vld [vmem:[#allocation11] sm:$0xff]
    %v470 = vld [vmem:[#allocation11 + $0x8] sm:$0xff]
    %v471 = vld [vmem:[#allocation11 + $0x10] sm:$0xff]
    %v472 = vld [vmem:[#allocation11 + $0x18] sm:$0xff]
    %v473 = vld [vmem:[#allocation11 + $0x20] sm:$0xff]
    %v474 = vld [vmem:[#allocation11 + $0x28] sm:$0xff]
    %v475 = vld [vmem:[#allocation11 + $0x30] sm:$0xff]
    %v476 = vld [vmem:[#allocation11 + $0x38] sm:$0xff]
    %v477 = vld [vmem:[#allocation11 + $0x40] sm:$0xff]
    %v478 = vld [vmem:[#allocation11 + $0x48] sm:$0xff]
    %v479 = vld [vmem:[#allocation11 + $0x50] sm:$0xff]
    %v480 = vld [vmem:[#allocation11 + $0x58] sm:$0xff]
    %v481 = vld [vmem:[#allocation11 + $0x60] sm:$0xff]
    %v482 = vld [vmem:[#allocation11 + $0x68] sm:$0xff]
    %v483 = vld [vmem:[#allocation11 + $0x70] sm:$0xff]
    %v484 = vld [vmem:[#allocation11 + $0x78] sm:$0xff]
    %v485 = vld [vmem:[#allocation11 + $0x80] sm:$0xff]
    %v486 = vld [vmem:[#allocation11 + $0x88] sm:$0xff]
    %v487 = vld [vmem:[#allocation11 + $0x90] sm:$0xff]
    %v488 = vld [vmem:[#allocation11 + $0x98] sm:$0xff]
    %v489 = vld [vmem:[#allocation11 + $0xa0] sm:$0xff]
    %v490 = vld [vmem:[#allocation11 + $0xa8] sm:$0xff]
    %v491 = vld [vmem:[#allocation11 + $0xb0] sm:$0xff]
    %v492 = vld [vmem:[#allocation11 + $0xb8] sm:$0xff]
    %v493 = vld [vmem:[#allocation11 + $0xc0] sm:$0xff]
    %v494 = vld [vmem:[#allocation11 + $0xc8] sm:$0xff]
    %v495 = vld [vmem:[#allocation11 + $0xd0] sm:$0xff]
    %v496 = vld [vmem:[#allocation11 + $0xd8] sm:$0xff]
    %v497 = vld [vmem:[#allocation11 + $0xe0] sm:$0xff]
    %v498 = vld [vmem:[#allocation11 + $0xe8] sm:$0xff]
    %v499 = vld [vmem:[#allocation11 + $0xf0] sm:$0xff]
    %v500 = vld [vmem:[#allocation11 + $0xf8] sm:$0xff]
    %v501 = vld [vmem:[#allocation11 + $0x100] sm:$0xff]
    %v502 = vld [vmem:[#allocation11 + $0x108] sm:$0xff]
    %v503 = vld [vmem:[#allocation11 + $0x110] sm:$0xff]
    %v504 = vld [vmem:[#allocation11 + $0x118] sm:$0xff]
    %v505 = vld [vmem:[#allocation11 + $0x120] sm:$0xff]
    %v506 = vld [vmem:[#allocation11 + $0x128] sm:$0xff]
    %v507 = vld [vmem:[#allocation11 + $0x130] sm:$0xff]
    %v508 = vld [vmem:[#allocation11 + $0x138] sm:$0xff]
    %v509 = vld [vmem:[#allocation11 + $0x140] sm:$0xff]
    %v510 = vld [vmem:[#allocation11 + $0x148] sm:$0xff]
    %v511 = vld [vmem:[#allocation11 + $0x150] sm:$0xff]
    %v512 = vld [vmem:[#allocation11 + $0x158] sm:$0xff]
    %v513 = vld [vmem:[#allocation11 + $0x160] sm:$0xff]
    %v514 = vld [vmem:[#allocation11 + $0x168] sm:$0xff]
    %v515 = vld [vmem:[#allocation11 + $0x170] sm:$0xff]
    %v516 = vld [vmem:[#allocation11 + $0x178] sm:$0xff]
    %517 = vmatprep.subr.mxu0 %v470
    %518 = vmatpush1.msra.mxu0 %v469
    %519 = vmatprep.subr.mxu0 %v473
    %520 = vmatpush1.msra.mxu0 %v472
    %521 = vmatprep.subr.mxu0 %v476
    %522 = vmatpush1.msra.mxu0 %v475
    %523 = vmatprep.subr.mxu0 %v479
    %524 = vmatpush1.msra.mxu0 %v478
    %525 = vmatprep.subr.mxu0 %v482
    %526 = vmatpush1.msra.mxu0 %v481
    %527 = vmatprep.subr.mxu0 %v485
    %528 = vmatpush1.msra.mxu0 %v484
    %529 = vmatprep.subr.mxu0 %v488
    %530 = vmatpush1.msra.mxu0 %v487
    %531 = vmatprep.subr.mxu0 %v491
    %532 = vmatpush1.msra.mxu0 %v490
    %533 = vmatprep.subr.mxu0 %v494
    %534 = vmatpush1.msra.mxu0 %v493
    %535 = vmatprep.subr.mxu0 %v497
    %536 = vmatpush1.msra.mxu0 %v496
    %537 = vmatprep.subr.mxu0 %v500
    %538 = vmatpush1.msra.mxu0 %v499
    %539 = vmatprep.subr.mxu0 %v503
    %540 = vmatpush1.msra.mxu0 %v502
    %541 = vmatprep.subr.mxu0 %v506
    %542 = vmatpush1.msra.mxu0 %v505
    %543 = vmatprep.subr.mxu0 %v509
    %544 = vmatpush1.msra.mxu0 %v508
    %545 = vmatprep.subr.mxu0 %v512
    %546 = vmatpush1.msra.mxu0 %v511
    %547 = vmatprep.subr.mxu0 %v515
    %548 = vmatpush1.msra.mxu0 %v514
    %549 = vmatprep.subr.mxu0 0.0
    %550 = vmatpush1.msra.mxu0 0.0
    %551 = vmatprep.subr.mxu0 0.0
    %552 = vmatpush1.msra.mxu0 0.0
    %553 = vmatprep.subr.mxu0 0.0
    %554 = vmatpush1.msra.mxu0 0.0
    %555 = vmatprep.subr.mxu0 0.0
    %556 = vmatpush1.msra.mxu0 0.0
    %557 = vmatprep.subr.mxu0 0.0
    %558 = vmatpush1.msra.mxu0 0.0
    %559 = vmatprep.subr.mxu0 0.0
    %560 = vmatpush1.msra.mxu0 0.0
    %561 = vmatprep.subr.mxu0 0.0
    %562 = vmatpush1.msra.mxu0 0.0
    %563 = vmatprep.subr.mxu0 0.0
    %564 = vmatpush1.msra.mxu0 0.0
    %565 = vmatprep.subr.mxu0 0.0
    %566 = vmatpush1.msra.mxu0 0.0
    %567 = vmatprep.subr.mxu0 0.0
    %568 = vmatpush1.msra.mxu0 0.0
    %569 = vmatprep.subr.mxu0 0.0
    %570 = vmatpush1.msra.mxu0 0.0
    %571 = vmatprep.subr.mxu0 0.0
    %572 = vmatpush1.msra.mxu0 0.0
    %573 = vmatprep.subr.mxu0 0.0
    %574 = vmatpush1.msra.mxu0 0.0
    %575 = vmatprep.subr.mxu0 0.0
    %576 = vmatpush1.msra.mxu0 0.0
    %577 = vmatprep.subr.mxu0 0.0
    %578 = vmatpush1.msra.mxu0 0.0
    %579 = vmatprep.subr.mxu0 0.0
    %580 = vmatpush1.msra.mxu0 0.0
    %581 = vmatprep.mubr.f32.mxu0 0.0
    %582 = vmatmul.mubr.f32.gmra.mrb[0].mxu0 %v107
    %v583 = vpop.f32.mrb[0].mxu0
    %v584 = vadd.f32 0.0, %v583
    %v585 = vpop.f32.mrb[0].mxu0
    %v586 = vadd.f32 0.0, %v585
    %587 = vdwg.mxu0
    %588 = vmatprep.subr.mxu0 0.0
    %589 = vmatpush1.msra.mxu0 %v471
    %590 = vmatprep.subr.mxu0 0.0
    %591 = vmatpush1.msra.mxu0 %v474
    %592 = vmatprep.subr.mxu0 0.0
    %593 = vmatpush1.msra.mxu0 %v477
    %594 = vmatprep.subr.mxu0 0.0
    %595 = vmatpush1.msra.mxu0 %v480
    %596 = vmatprep.subr.mxu0 0.0
    %597 = vmatpush1.msra.mxu0 %v483
    %598 = vmatprep.subr.mxu0 0.0
    %599 = vmatpush1.msra.mxu0 %v486
    %600 = vmatprep.subr.mxu0 0.0
    %601 = vmatpush1.msra.mxu0 %v489
    %602 = vmatprep.subr.mxu0 0.0
    %603 = vmatpush1.msra.mxu0 %v492
    %604 = vmatprep.subr.mxu0 0.0
    %605 = vmatpush1.msra.mxu0 %v495
    %606 = vmatprep.subr.mxu0 0.0
    %607 = vmatpush1.msra.mxu0 %v498
    %608 = vmatprep.subr.mxu0 0.0
    %609 = vmatpush1.msra.mxu0 %v501
    %610 = vmatprep.subr.mxu0 0.0
    %611 = vmatpush1.msra.mxu0 %v504
    %612 = vmatprep.subr.mxu0 0.0
    %613 = vmatpush1.msra.mxu0 %v507
    %614 = vmatprep.subr.mxu0 0.0
    %615 = vmatpush1.msra.mxu0 %v510
    %616 = vmatprep.subr.mxu0 0.0
    %617 = vmatpush1.msra.mxu0 %v513
    %618 = vmatprep.subr.mxu0 0.0
    %619 = vmatpush1.msra.mxu0 %v516
    %620 = vmatprep.subr.mxu0 0.0
    %621 = vmatpush1.msra.mxu0 0.0
    %622 = vmatprep.subr.mxu0 0.0
    %623 = vmatpush1.msra.mxu0 0.0
    %624 = vmatprep.subr.mxu0 0.0
    %625 = vmatpush1.msra.mxu0 0.0
    %626 = vmatprep.subr.mxu0 0.0
    %627 = vmatpush1.msra.mxu0 0.0
    %628 = vmatprep.subr.mxu0 0.0
    %629 = vmatpush1.msra.mxu0 0.0
    %630 = vmatprep.subr.mxu0 0.0
    %631 = vmatpush1.msra.mxu0 0.0
    %632 = vmatprep.subr.mxu0 0.0
    %633 = vmatpush1.msra.mxu0 0.0
    %634 = vmatprep.subr.mxu0 0.0
    %635 = vmatpush1.msra.mxu0 0.0
    %636 = vmatprep.subr.mxu0 0.0
    %637 = vmatpush1.msra.mxu0 0.0
    %638 = vmatprep.subr.mxu0 0.0
    %639 = vmatpush1.msra.mxu0 0.0
    %640 = vmatprep.subr.mxu0 0.0
    %641 = vmatpush1.msra.mxu0 0.0
    %642 = vmatprep.subr.mxu0 0.0
    %643 = vmatpush1.msra.mxu0 0.0
    %644 = vmatprep.subr.mxu0 0.0
    %645 = vmatpush1.msra.mxu0 0.0
    %646 = vmatprep.subr.mxu0 0.0
    %647 = vmatpush1.msra.mxu0 0.0
    %648 = vmatprep.subr.mxu0 0.0
    %649 = vmatpush1.msra.mxu0 0.0
    %650 = vmatprep.subr.mxu0 0.0
    %651 = vmatpush1.msra.mxu0 0.0
    %652 = vmatprep.mubr.f32.mxu0 0.0
    %653 = vmatmul.mubr.f32.gmra.mrb[0].mxu0 %v107
    %v654 = vpop.f32.mrb[0].mxu0
    %v655 = vadd.f32 0.0, %v654
    %v656 = vpop.f32.mrb[0].mxu0
    %657 = vdwg.mxu0
    %v658 = vadd.f32 %v466, %v584
    %v659 = vxor.u32 %v658, 2147483648
    %v660 = vmul.f32 %v659, 1.442695
    %v661 = vpow.pop %v660
    %v662 = vadd.f32 %v661, 1.0
    %v663 = vrcp.pop %v662
    %v664 = vmul.f32 1.0, %v663
    %v665 = vadd.f32 %v467, %v586
    %v666 = vxor.u32 %v665, 2147483648
    %v667 = vmul.f32 %v666, 1.442695
    %v668 = vpow.pop %v667
    %v669 = vadd.f32 %v668, 1.0
    %v670 = vrcp.pop %v669
    %v671 = vmul.f32 1.0, %v670
    %v672 = vld [vmem:[%s7] sm:$0x1]
    %v674 = vlaneseq
    %v675 = vshrl.u32 %v674, 7
    %v676 = vsub.s32 0, %v675
    %v677 = vrot.slane %v672, %v676
    %v679 = vadd.f32 %v655, %v677
    %v680 = vmul.f32 %v664, %v679
    %v681 = vadd.f32 %v468, %v680
    %v682 = vtanh.pop %v681
    %v683 = vsub.f32 1.0, %v671
    %v684 = vmul.f32 %v683, %v682
    %v685 = vmul.f32 %v671, %v107
    %v686 = vadd.f32 %v684, %v685
    %687 = vst [vmem:[#allocation13] sm:$0xff] %v686
    // Predicated region
    $region58: #{tpu_custom_call.1} parent=1 // pred_check
      _
    $region59: #{tpu_custom_call.1} parent=1 // pred_check_branch
      %689 = sbr.rel (0) target = $region61
    $region60: #{tpu_custom_call.1} parent=1 // pred_region
      %s691 = ssub.s32 128, 128
      %692 = vsyncadd [#allocation4], %s691
      %s694 = sshll.u32 [#allocation13], 4
      %s695 = int_to_ptr.vmem [resolvable:$true] %s694
      %697 = dma.vmem_to_hbm [thread:$0]  %s695, 128, %s8, [#allocation4]
    $region61: #{tpu_custom_call.1} parent=1 // pred_fallthru
      _
    // Predicated region
    $region62: #{tpu_custom_call.1} parent=1 // pred_check
      _
    $region63: #{tpu_custom_call.1} parent=1 // pred_check_branch
      %699 = sbr.rel (0) target = $region65
    $region64: #{tpu_custom_call.1} parent=1 // pred_region
      %700 = dma.done [#allocation4], 128
    $region65: #{tpu_custom_call.1} parent=1 // pred_fallthru
      _
    %701 = vsyncpa [#allocation3], 1
    %702 = vsyncpa [#allocation6], 1
    %703 = vsyncpa [#allocation9], 1
    %704 = vsyncpa [#allocation12], 1
    %705 = vsyncpa [#allocation4], 1

</llo_original>
